<compile_context>
chip_gen: v5e
topology: v5e:2x2
jax: 0.10.0
libtpu: 0.0.40
codegen_flags: <defaults>
</compile_context>

<pallas_src>
import functools

import jax
import jax.numpy as jnp
from jax import lax
from jax.experimental import pallas as pl
from jax.experimental.pallas import tpu as pltpu


def _round_up(x, m):
    return ((x + m - 1) // m) * m


def _lstm_kernel(x_ref, wih_ref, whh_ref, bias_ref, out_ref,
                 pre_sc, h_sc, c_sc, *, H_pad, T_tile, B_tile, T, unroll):
    """One grid step = one (batch block, time block).

    x_ref    : (T_tile, B_tile, I_pad) f32   raw inputs for this block
    wih_ref  : (I_pad, 4*H_pad)        f32   input->gates weights (transposed)
    whh_ref  : (H_pad, 4*H_pad)        bf16  hidden->gates weights (transposed)
    bias_ref : (1, 4*H_pad)            f32   b_ih + b_hh (per-gate padded)
    out_ref  : (B_tile, H_pad)         f32   h at the last timestep
    pre_sc   : (T_tile*B_tile, 4*H_pad) f32  VMEM scratch: fused input proj.
    h_sc/c_sc: (B_tile, H_pad)         f32   VMEM scratch carrying state across
                                             the serial time-block grid axis.
    """
    t_blk = pl.program_id(1)

    # h0 = c0 = zeros at the start of every batch block (time axis innermost).
    @pl.when(t_blk == 0)
    def _():
        h_sc[...] = jnp.zeros_like(h_sc)
        c_sc[...] = jnp.zeros_like(c_sc)

    # ---- fused input projection for this time block (off the serial path) ---
    x_blk = x_ref[...]                                    # (T_tile, B_tile, I_pad)
    x2 = x_blk.reshape(T_tile * B_tile, x_blk.shape[-1])
    pre_sc[...] = (
        jnp.dot(x2, wih_ref[...], preferred_element_type=jnp.float32)
        + bias_ref[...]
    )

    whh = whh_ref[...]            # loop-invariant bf16 (H_pad, 4*H_pad), ~2 vregs
    ragged = (T % T_tile) != 0    # static

    def step(t, carry):
        h_prev, c_prev = carry
        off = pl.multiple_of(t * B_tile, B_tile)
        pre = pre_sc[pl.ds(off, B_tile), :]               # (B_tile, 4*H_pad)
        # Only the h-dependent matmul sits on the serial critical path.
        gates = pre + jnp.dot(h_prev.astype(jnp.bfloat16), whh,
                              preferred_element_type=jnp.float32)
        i_g = jax.nn.sigmoid(gates[:, 0 * H_pad:1 * H_pad])
        f_g = jax.nn.sigmoid(gates[:, 1 * H_pad:2 * H_pad])
        g_g = jnp.tanh(gates[:, 2 * H_pad:3 * H_pad])
        o_g = jax.nn.sigmoid(gates[:, 3 * H_pad:4 * H_pad])
        c_new = f_g * c_prev + i_g * g_g
        h_new = o_g * jnp.tanh(c_new)
        if ragged:
            # Mask out zero-padded timesteps of the last (ragged) time block.
            valid = (t_blk * T_tile + t) < T
            h_new = jnp.where(valid, h_new, h_prev)
            c_new = jnp.where(valid, c_new, c_prev)
        return (h_new, c_new)

    h_fin, c_fin = lax.fori_loop(0, T_tile, step, (h_sc[...], c_sc[...]),
                                 unroll=unroll)

    # Persist the carried state across time blocks (once per grid block).
    h_sc[...] = h_fin
    c_sc[...] = c_fin

    # Last time block: emit the final hidden state (fc is done in the wrapper).
    @pl.when(t_blk == pl.num_programs(1) - 1)
    def _():
        out_ref[...] = h_fin


def lstm_model_forward(x, params):
    """x: (B, T, I) float32, batch_first (same as the PyTorch module)."""
    w_ih, w_hh, b_ih, b_hh, w_fc, b_fc = params
    B, T, I = x.shape
    H = w_hh.shape[1]
    O = w_fc.shape[0]

    # --- padding -------------------------------------------------------------
    # Pad each gate's H only to a multiple of 32 so 4*H_pad is a 128-lane
    # multiple (H=32 -> no padding, gate width 128).  Padded gate lanes get
    # zero weights/bias, padded h inputs hit zero W_hh rows, so the padded
    # hidden/cell entries never influence the real ones.
    H_pad = _round_up(H, 32)
    G = 4 * H_pad
    I_pad = _round_up(max(I, 8), 8)

    B_tile = min(_round_up(max(B, 8), 8), 64)   # f32 sublane multiple
    B_pad = _round_up(B, B_tile)
    n_b = B_pad // B_tile

    # Time tiling: large blocks amortize the ~0.35us/grid-step overhead; cap so
    # the in-kernel pre-activation scratch stays small (<~4 MiB) on every TPU
    # generation (v7x has only 64 MiB physical VMEM).
    t_cap = max(1, (4 * 1024 * 1024) // (B_tile * G * 4))
    T_tile = max(1, min(T, 128, t_cap))
    n_t = -(-T // T_tile)
    T_pad = n_t * T_tile

    # --- parameter packing ----------------------------------------------------
    def pad_gates(w):
        """(4H, ...) torch-gate-stacked -> (4*H_pad, ...), per-gate zero pad."""
        tail = w.shape[1:]
        w4 = w.reshape((4, H) + tail)
        pad = [(0, 0), (0, H_pad - H)] + [(0, 0)] * len(tail)
        return jnp.pad(w4, pad).reshape((4 * H_pad,) + tail)

    w_ih_p = pad_gates(w_ih.astype(jnp.float32))                     # (G, I)
    w_ih_p = jnp.pad(w_ih_p, ((0, 0), (0, I_pad - I)))               # (G, I_pad)
    w_hh_p = pad_gates(w_hh.astype(jnp.float32))                     # (G, H)
    w_hh_p = jnp.pad(w_hh_p, ((0, 0), (0, H_pad - H)))               # (G, H_pad)
    bias_p = pad_gates((b_ih + b_hh).astype(jnp.float32)).reshape(1, G)

    wih_t = w_ih_p.T                                                 # (I_pad, G) f32
    whh_t = w_hh_p.T.astype(jnp.bfloat16)                            # (H_pad, G) bf16

    # x: (B, T, I) -> time-major padded (T_pad, B_pad, I_pad) for block streaming.
    x_p = jnp.pad(x.astype(jnp.float32),
                  ((0, B_pad - B), (0, T_pad - T), (0, I_pad - I)))
    x_tbi = jnp.transpose(x_p, (1, 0, 2))

    # --- kernel launch ---------------------------------------------------------
    flops = 2 * T_pad * B_pad * I_pad * G + 2 * T * B_pad * H_pad * G
    transcendentals = 5 * T * B_pad * H_pad
    bytes_accessed = (x_tbi.size * 4 + wih_t.size * 4 + whh_t.size * 2
                      + bias_p.size * 4 + B_pad * H_pad * 4)

    kernel = functools.partial(
        _lstm_kernel, H_pad=H_pad, T_tile=T_tile, B_tile=B_tile, T=T,
        unroll=min(T_tile, 8))

    h_last = pl.pallas_call(
        kernel,
        out_shape=jax.ShapeDtypeStruct((B_pad, H_pad), jnp.float32),
        grid=(n_b, n_t),
        in_specs=[
            pl.BlockSpec((T_tile, B_tile, I_pad), lambda b, t: (t, b, 0)),  # x
            pl.BlockSpec((I_pad, G), lambda b, t: (0, 0)),                  # W_ih^T
            pl.BlockSpec((H_pad, G), lambda b, t: (0, 0)),                  # W_hh^T
            pl.BlockSpec((1, G), lambda b, t: (0, 0)),                      # bias
        ],
        out_specs=pl.BlockSpec((B_tile, H_pad), lambda b, t: (b, 0)),
        scratch_shapes=[
            pltpu.VMEM((T_tile * B_tile, G), jnp.float32),   # fused input proj.
            pltpu.VMEM((B_tile, H_pad), jnp.float32),        # h state
            pltpu.VMEM((B_tile, H_pad), jnp.float32),        # c state
        ],
        compiler_params=pltpu.CompilerParams(
            dimension_semantics=("parallel", "arbitrary")),
        cost_estimate=pl.CostEstimate(
            flops=flops, transcendentals=transcendentals,
            bytes_accessed=bytes_accessed),
    )(x_tbi, wih_t, whh_t, bias_p)

    # Final Linear on the last timestep's hidden state (tiny O; kept in f32 XLA
    # so the kernel output stays lane-dense and two constants leave the pipeline).
    h_T = h_last[:B, :H]
    return h_T @ w_fc.T.astype(jnp.float32) + b_fc.astype(jnp.float32)


def lstm_model_reference(x, params):
    """Pure-JAX f32 reference mirroring torch.nn.LSTM + Linear."""
    w_ih, w_hh, b_ih, b_hh, w_fc, b_fc = params
    B, T, I = x.shape
    H = w_hh.shape[1]
    h = jnp.zeros((B, H), jnp.float32)
    c = jnp.zeros((B, H), jnp.float32)
    for t in range(T):
        gates = x[:, t, :] @ w_ih.T + b_ih + h @ w_hh.T + b_hh
        i_g = jax.nn.sigmoid(gates[:, 0 * H:1 * H])
        f_g = jax.nn.sigmoid(gates[:, 1 * H:2 * H])
        g_g = jnp.tanh(gates[:, 2 * H:3 * H])
        o_g = jax.nn.sigmoid(gates[:, 3 * H:4 * H])
        c = f_g * c + i_g * g_g
        h = o_g * jnp.tanh(c)
    return h @ w_fc.T + b_fc


def init_params(key, input_size, hidden_size, output_size):
    """Deterministic synthetic parameters (torch-style uniform init shapes)."""
    k = jax.random.split(key, 6)
    s = 1.0 / jnp.sqrt(hidden_size)
    w_ih = jax.random.uniform(k[0], (4 * hidden_size, input_size), jnp.float32, -s, s)
    w_hh = jax.random.uniform(k[1], (4 * hidden_size, hidden_size), jnp.float32, -s, s)
    b_ih = jax.random.uniform(k[2], (4 * hidden_size,), jnp.float32, -s, s)
    b_hh = jax.random.uniform(k[3], (4 * hidden_size,), jnp.float32, -s, s)
    w_fc = jax.random.uniform(k[4], (output_size, hidden_size), jnp.float32, -s, s)
    b_fc = jax.random.uniform(k[5], (output_size,), jnp.float32, -s, s)
    return (w_ih, w_hh, b_ih, b_hh, w_fc, b_fc)


if __name__ == "__main__":
    # Shapes consistent with the module's forward: (batch, seq, input_size)
    batch, seq, input_size = 2, 8, 4
    hidden_size, output_size = 32, 1

    key = jax.random.PRNGKey(0)
    kx, kp = jax.random.split(key)
    x = jax.random.normal(kx, (batch, seq, input_size), dtype=jnp.float32)
    params = init_params(kp, input_size, hidden_size, output_size)

    out = lstm_model_forward(x, params)
    out = jax.block_until_ready(out)
    assert out.shape == (batch, output_size)

    # bf16 recurrent matmul (f32 accumulation) => tolerance vs f32 reference.
    ref = lstm_model_reference(x, params)
    assert jnp.allclose(out, ref, atol=5e-2, rtol=5e-2), (out, ref)

    print("KERNEL_OK")
</pallas_src>

<mosaic_0001>
module attributes {stable_mosaic.version = 11 : i64} {
  func.func @_lstm_kernel(%arg0: i32, %arg1: i32, %arg2: memref<8x8x8xf32, #tpu.memory_space<vmem>>, %arg3: memref<8x128xf32, #tpu.memory_space<vmem>>, %arg4: memref<32x128xbf16, #tpu.memory_space<vmem>>, %arg5: memref<1x128xf32, #tpu.memory_space<vmem>>, %arg6: memref<8x32xf32, #tpu.memory_space<vmem>>, %arg7: memref<64x128xf32, #tpu.memory_space<vmem>>, %arg8: memref<8x32xf32, #tpu.memory_space<vmem>>, %arg9: memref<8x32xf32, #tpu.memory_space<vmem>>) attributes {dimension_semantics = [#tpu.dimension_semantics<parallel>, #tpu.dimension_semantics<arbitrary>], iteration_bounds = array<i64: 1, 1>, scalar_prefetch = 0 : i64, scratch_operands = 3 : i64, tpu.core_type = #tpu.core_type<tc>, window_params = [{transform_indices = @transform_0, window_bounds = array<i64: 8, 8, 8>}, {pipeline_mode = #tpu.pipeline_mode<synchronous>, transform_indices = @transform_1, window_bounds = array<i64: 8, 128>}, {pipeline_mode = #tpu.pipeline_mode<synchronous>, transform_indices = @transform_2, window_bounds = array<i64: 32, 128>}, {pipeline_mode = #tpu.pipeline_mode<synchronous>, transform_indices = @transform_3, window_bounds = array<i64: 1, 128>}, {transform_indices = @transform_4, window_bounds = array<i64: 8, 32>}]} {
    %c0_i32 = arith.constant 0 : i32
    %0 = arith.cmpi eq, %arg1, %c0_i32 : i32
    %1 = arith.extui %0 : i1 to i32
    %c0_i32_0 = arith.constant 0 : i32
    %2 = arith.cmpi ne, %1, %c0_i32_0 : i32
    scf.if %2 {
      %cst_70 = arith.constant 0.000000e+00 : f32
      %275 = vector.broadcast %cst_70 : f32 to vector<8x32xf32>
      %c0_71 = arith.constant 0 : index
      %c0_72 = arith.constant 0 : index
      %276 = vector.load %arg8[%c0_71, %c0_72] : memref<8x32xf32, #tpu.memory_space<vmem>>, vector<8x32xf32>
      tpu.vector_store %arg8[%c0_71, %c0_72], %275 {strides = array<i32>} : memref<8x32xf32, #tpu.memory_space<vmem>>, vector<8x32xf32>,
      %cst_73 = arith.constant 0.000000e+00 : f32
      %277 = vector.broadcast %cst_73 : f32 to vector<8x32xf32>
      %c0_74 = arith.constant 0 : index
      %c0_75 = arith.constant 0 : index
      %278 = vector.load %arg9[%c0_74, %c0_75] : memref<8x32xf32, #tpu.memory_space<vmem>>, vector<8x32xf32>
      tpu.vector_store %arg9[%c0_74, %c0_75], %277 {strides = array<i32>} : memref<8x32xf32, #tpu.memory_space<vmem>>, vector<8x32xf32>,
    } else {
    }
    %c0 = arith.constant 0 : index
    %c0_1 = arith.constant 0 : index
    %c0_2 = arith.constant 0 : index
    %3 = vector.load %arg2[%c0, %c0_1, %c0_2] : memref<8x8x8xf32, #tpu.memory_space<vmem>>, vector<8x8x8xf32>
    %4 = vector.shape_cast %3 : vector<8x8x8xf32> to vector<64x8xf32>
    %c0_3 = arith.constant 0 : index
    %c0_4 = arith.constant 0 : index
    %5 = vector.load %arg3[%c0_3, %c0_4] : memref<8x128xf32, #tpu.memory_space<vmem>>, vector<8x128xf32>
    %cst = arith.constant dense<0.000000e+00> : vector<64x128xf32>
    %6 = tpu.matmul %4, %5, %cst {dimension_numbers = #tpu.dot_dimension_numbers<[1], [0], [0], [1], [0, 0, 1, 1], [], []>} : vector<64x8xf32>, vector<8x128xf32>, vector<64x128xf32> -> vector<64x128xf32>
    %c0_5 = arith.constant 0 : index
    %c0_6 = arith.constant 0 : index
    %7 = vector.load %arg5[%c0_5, %c0_6] : memref<1x128xf32, #tpu.memory_space<vmem>>, vector<1x128xf32>
    %8 = vector.broadcast %7 : vector<1x128xf32> to vector<64x128xf32>
    %9 = arith.addf %6, %8 : vector<64x128xf32>
    %c0_7 = arith.constant 0 : index
    %c0_8 = arith.constant 0 : index
    %10 = vector.load %arg7[%c0_7, %c0_8] : memref<64x128xf32, #tpu.memory_space<vmem>>, vector<64x128xf32>
    tpu.vector_store %arg7[%c0_7, %c0_8], %9 {strides = array<i32>} : memref<64x128xf32, #tpu.memory_space<vmem>>, vector<64x128xf32>,
    %c0_9 = arith.constant 0 : index
    %c0_10 = arith.constant 0 : index
    %11 = vector.load %arg4[%c0_9, %c0_10] : memref<32x128xbf16, #tpu.memory_space<vmem>>, vector<32x128xbf16>
    %c0_11 = arith.constant 0 : index
    %c0_12 = arith.constant 0 : index
    %12 = vector.load %arg8[%c0_11, %c0_12] : memref<8x32xf32, #tpu.memory_space<vmem>>, vector<8x32xf32>
    %c0_13 = arith.constant 0 : index
    %c0_14 = arith.constant 0 : index
    %13 = vector.load %arg9[%c0_13, %c0_14] : memref<8x32xf32, #tpu.memory_space<vmem>>, vector<8x32xf32>
    %c0_i32_15 = arith.constant 0 : i32
    %c8_i32 = arith.constant 8 : i32
    %14 = arith.muli %c0_i32_15, %c8_i32 : i32
    %15 = tpu.assume_multiple %14, 8 : i32
    %16 = arith.index_cast %15 : i32 to index
    %c0_16 = arith.constant 0 : index
    %17 = vector.load %arg7[%16, %c0_16] : memref<64x128xf32, #tpu.memory_space<vmem>>, vector<8x128xf32>
    %18 = arith.truncf %12 : vector<8x32xf32> to vector<8x32xbf16>
    %cst_17 = arith.constant dense<0.000000e+00> : vector<8x128xf32>
    %19 = tpu.matmul %18, %11, %cst_17 {dimension_numbers = #tpu.dot_dimension_numbers<[1], [0], [0], [1], [0, 0, 1, 1], [], []>} : vector<8x32xbf16>, vector<32x128xbf16>, vector<8x128xf32> -> vector<8x128xf32>
    %20 = arith.addf %17, %19 : vector<8x128xf32>
    %21 = vector.extract_strided_slice %20 {offsets = [0, 0], sizes = [8, 32], strides = [1, 1]} : vector<8x128xf32> to vector<8x32xf32>
    %22 = arith.negf %21 : vector<8x32xf32>
    %23 = math.exp %22 : vector<8x32xf32>
    %cst_18 = arith.constant 1.000000e+00 : f32
    %24 = vector.broadcast %cst_18 : f32 to vector<8x32xf32>
    %25 = arith.addf %24, %23 : vector<8x32xf32>
    %26 = arith.divf %24, %25 : vector<8x32xf32>
    %27 = vector.extract_strided_slice %20 {offsets = [0, 32], sizes = [8, 32], strides = [1, 1]} : vector<8x128xf32> to vector<8x32xf32>
    %28 = arith.negf %27 : vector<8x32xf32>
    %29 = math.exp %28 : vector<8x32xf32>
    %cst_19 = arith.constant 1.000000e+00 : f32
    %30 = vector.broadcast %cst_19 : f32 to vector<8x32xf32>
    %31 = arith.addf %30, %29 : vector<8x32xf32>
    %32 = arith.divf %30, %31 : vector<8x32xf32>
    %33 = vector.extract_strided_slice %20 {offsets = [0, 64], sizes = [8, 32], strides = [1, 1]} : vector<8x128xf32> to vector<8x32xf32>
    %34 = math.tanh %33 : vector<8x32xf32>
    %35 = vector.extract_strided_slice %20 {offsets = [0, 96], sizes = [8, 32], strides = [1, 1]} : vector<8x128xf32> to vector<8x32xf32>
    %36 = arith.negf %35 : vector<8x32xf32>
    %37 = math.exp %36 : vector<8x32xf32>
    %cst_20 = arith.constant 1.000000e+00 : f32
    %38 = vector.broadcast %cst_20 : f32 to vector<8x32xf32>
    %39 = arith.addf %38, %37 : vector<8x32xf32>
    %40 = arith.divf %38, %39 : vector<8x32xf32>
    %41 = arith.mulf %32, %13 : vector<8x32xf32>
    %42 = arith.mulf %26, %34 : vector<8x32xf32>
    %43 = arith.addf %41, %42 : vector<8x32xf32>
    %44 = math.tanh %43 : vector<8x32xf32>
    %45 = arith.mulf %40, %44 : vector<8x32xf32>
    %c1_i32 = arith.constant 1 : i32
    %c8_i32_21 = arith.constant 8 : i32
    %46 = arith.muli %c1_i32, %c8_i32_21 : i32
    %47 = tpu.assume_multiple %46, 8 : i32
    %48 = arith.index_cast %47 : i32 to index
    %c0_22 = arith.constant 0 : index
    %49 = vector.load %arg7[%48, %c0_22] : memref<64x128xf32, #tpu.memory_space<vmem>>, vector<8x128xf32>
    %50 = arith.truncf %45 : vector<8x32xf32> to vector<8x32xbf16>
    %cst_23 = arith.constant dense<0.000000e+00> : vector<8x128xf32>
    %51 = tpu.matmul %50, %11, %cst_23 {dimension_numbers = #tpu.dot_dimension_numbers<[1], [0], [0], [1], [0, 0, 1, 1], [], []>} : vector<8x32xbf16>, vector<32x128xbf16>, vector<8x128xf32> -> vector<8x128xf32>
    %52 = arith.addf %49, %51 : vector<8x128xf32>
    %53 = vector.extract_strided_slice %52 {offsets = [0, 0], sizes = [8, 32], strides = [1, 1]} : vector<8x128xf32> to vector<8x32xf32>
    %54 = arith.negf %53 : vector<8x32xf32>
    %55 = math.exp %54 : vector<8x32xf32>
    %cst_24 = arith.constant 1.000000e+00 : f32
    %56 = vector.broadcast %cst_24 : f32 to vector<8x32xf32>
    %57 = arith.addf %56, %55 : vector<8x32xf32>
    %58 = arith.divf %56, %57 : vector<8x32xf32>
    %59 = vector.extract_strided_slice %52 {offsets = [0, 32], sizes = [8, 32], strides = [1, 1]} : vector<8x128xf32> to vector<8x32xf32>
    %60 = arith.negf %59 : vector<8x32xf32>
    %61 = math.exp %60 : vector<8x32xf32>
    %cst_25 = arith.constant 1.000000e+00 : f32
    %62 = vector.broadcast %cst_25 : f32 to vector<8x32xf32>
    %63 = arith.addf %62, %61 : vector<8x32xf32>
    %64 = arith.divf %62, %63 : vector<8x32xf32>
    %65 = vector.extract_strided_slice %52 {offsets = [0, 64], sizes = [8, 32], strides = [1, 1]} : vector<8x128xf32> to vector<8x32xf32>
    %66 = math.tanh %65 : vector<8x32xf32>
    %67 = vector.extract_strided_slice %52 {offsets = [0, 96], sizes = [8, 32], strides = [1, 1]} : vector<8x128xf32> to vector<8x32xf32>
    %68 = arith.negf %67 : vector<8x32xf32>
    %69 = math.exp %68 : vector<8x32xf32>
    %cst_26 = arith.constant 1.000000e+00 : f32
    %70 = vector.broadcast %cst_26 : f32 to vector<8x32xf32>
    %71 = arith.addf %70, %69 : vector<8x32xf32>
    %72 = arith.divf %70, %71 : vector<8x32xf32>
    %73 = arith.mulf %64, %43 : vector<8x32xf32>
    %74 = arith.mulf %58, %66 : vector<8x32xf32>
    %75 = arith.addf %73, %74 : vector<8x32xf32>
    %76 = math.tanh %75 : vector<8x32xf32>
    %77 = arith.mulf %72, %76 : vector<8x32xf32>
    %c2_i32 = arith.constant 2 : i32
    %c8_i32_27 = arith.constant 8 : i32
    %78 = arith.muli %c2_i32, %c8_i32_27 : i32
    %79 = tpu.assume_multiple %78, 8 : i32
    %80 = arith.index_cast %79 : i32 to index
    %c0_28 = arith.constant 0 : index
    %81 = vector.load %arg7[%80, %c0_28] : memref<64x128xf32, #tpu.memory_space<vmem>>, vector<8x128xf32>
    %82 = arith.truncf %77 : vector<8x32xf32> to vector<8x32xbf16>
    %cst_29 = arith.constant dense<0.000000e+00> : vector<8x128xf32>
    %83 = tpu.matmul %82, %11, %cst_29 {dimension_numbers = #tpu.dot_dimension_numbers<[1], [0], [0], [1], [0, 0, 1, 1], [], []>} : vector<8x32xbf16>, vector<32x128xbf16>, vector<8x128xf32> -> vector<8x128xf32>
    %84 = arith.addf %81, %83 : vector<8x128xf32>
    %85 = vector.extract_strided_slice %84 {offsets = [0, 0], sizes = [8, 32], strides = [1, 1]} : vector<8x128xf32> to vector<8x32xf32>
    %86 = arith.negf %85 : vector<8x32xf32>
    %87 = math.exp %86 : vector<8x32xf32>
    %cst_30 = arith.constant 1.000000e+00 : f32
    %88 = vector.broadcast %cst_30 : f32 to vector<8x32xf32>
    %89 = arith.addf %88, %87 : vector<8x32xf32>
    %90 = arith.divf %88, %89 : vector<8x32xf32>
    %91 = vector.extract_strided_slice %84 {offsets = [0, 32], sizes = [8, 32], strides = [1, 1]} : vector<8x128xf32> to vector<8x32xf32>
    %92 = arith.negf %91 : vector<8x32xf32>
    %93 = math.exp %92 : vector<8x32xf32>
    %cst_31 = arith.constant 1.000000e+00 : f32
    %94 = vector.broadcast %cst_31 : f32 to vector<8x32xf32>
    %95 = arith.addf %94, %93 : vector<8x32xf32>
    %96 = arith.divf %94, %95 : vector<8x32xf32>
    %97 = vector.extract_strided_slice %84 {offsets = [0, 64], sizes = [8, 32], strides = [1, 1]} : vector<8x128xf32> to vector<8x32xf32>
    %98 = math.tanh %97 : vector<8x32xf32>
    %99 = vector.extract_strided_slice %84 {offsets = [0, 96], sizes = [8, 32], strides = [1, 1]} : vector<8x128xf32> to vector<8x32xf32>
    %100 = arith.negf %99 : vector<8x32xf32>
    %101 = math.exp %100 : vector<8x32xf32>
    %cst_32 = arith.constant 1.000000e+00 : f32
    %102 = vector.broadcast %cst_32 : f32 to vector<8x32xf32>
    %103 = arith.addf %102, %101 : vector<8x32xf32>
    %104 = arith.divf %102, %103 : vector<8x32xf32>
    %105 = arith.mulf %96, %75 : vector<8x32xf32>
    %106 = arith.mulf %90, %98 : vector<8x32xf32>
    %107 = arith.addf %105, %106 : vector<8x32xf32>
    %108 = math.tanh %107 : vector<8x32xf32>
    %109 = arith.mulf %104, %108 : vector<8x32xf32>
    %c3_i32 = arith.constant 3 : i32
    %c8_i32_33 = arith.constant 8 : i32
    %110 = arith.muli %c3_i32, %c8_i32_33 : i32
    %111 = tpu.assume_multiple %110, 8 : i32
    %112 = arith.index_cast %111 : i32 to index
    %c0_34 = arith.constant 0 : index
    %113 = vector.load %arg7[%112, %c0_34] : memref<64x128xf32, #tpu.memory_space<vmem>>, vector<8x128xf32>
    %114 = arith.truncf %109 : vector<8x32xf32> to vector<8x32xbf16>
    %cst_35 = arith.constant dense<0.000000e+00> : vector<8x128xf32>
    %115 = tpu.matmul %114, %11, %cst_35 {dimension_numbers = #tpu.dot_dimension_numbers<[1], [0], [0], [1], [0, 0, 1, 1], [], []>} : vector<8x32xbf16>, vector<32x128xbf16>, vector<8x128xf32> -> vector<8x128xf32>
    %116 = arith.addf %113, %115 : vector<8x128xf32>
    %117 = vector.extract_strided_slice %116 {offsets = [0, 0], sizes = [8, 32], strides = [1, 1]} : vector<8x128xf32> to vector<8x32xf32>
    %118 = arith.negf %117 : vector<8x32xf32>
    %119 = math.exp %118 : vector<8x32xf32>
    %cst_36 = arith.constant 1.000000e+00 : f32
    %120 = vector.broadcast %cst_36 : f32 to vector<8x32xf32>
    %121 = arith.addf %120, %119 : vector<8x32xf32>
    %122 = arith.divf %120, %121 : vector<8x32xf32>
    %123 = vector.extract_strided_slice %116 {offsets = [0, 32], sizes = [8, 32], strides = [1, 1]} : vector<8x128xf32> to vector<8x32xf32>
    %124 = arith.negf %123 : vector<8x32xf32>
    %125 = math.exp %124 : vector<8x32xf32>
    %cst_37 = arith.constant 1.000000e+00 : f32
    %126 = vector.broadcast %cst_37 : f32 to vector<8x32xf32>
    %127 = arith.addf %126, %125 : vector<8x32xf32>
    %128 = arith.divf %126, %127 : vector<8x32xf32>
    %129 = vector.extract_strided_slice %116 {offsets = [0, 64], sizes = [8, 32], strides = [1, 1]} : vector<8x128xf32> to vector<8x32xf32>
    %130 = math.tanh %129 : vector<8x32xf32>
    %131 = vector.extract_strided_slice %116 {offsets = [0, 96], sizes = [8, 32], strides = [1, 1]} : vector<8x128xf32> to vector<8x32xf32>
    %132 = arith.negf %131 : vector<8x32xf32>
    %133 = math.exp %132 : vector<8x32xf32>
    %cst_38 = arith.constant 1.000000e+00 : f32
    %134 = vector.broadcast %cst_38 : f32 to vector<8x32xf32>
    %135 = arith.addf %134, %133 : vector<8x32xf32>
    %136 = arith.divf %134, %135 : vector<8x32xf32>
    %137 = arith.mulf %128, %107 : vector<8x32xf32>
    %138 = arith.mulf %122, %130 : vector<8x32xf32>
    %139 = arith.addf %137, %138 : vector<8x32xf32>
    %140 = math.tanh %139 : vector<8x32xf32>
    %141 = arith.mulf %136, %140 : vector<8x32xf32>
    %c4_i32 = arith.constant 4 : i32
    %c8_i32_39 = arith.constant 8 : i32
    %142 = arith.muli %c4_i32, %c8_i32_39 : i32
    %143 = tpu.assume_multiple %142, 8 : i32
    %144 = arith.index_cast %143 : i32 to index
    %c0_40 = arith.constant 0 : index
    %145 = vector.load %arg7[%144, %c0_40] : memref<64x128xf32, #tpu.memory_space<vmem>>, vector<8x128xf32>
    %146 = arith.truncf %141 : vector<8x32xf32> to vector<8x32xbf16>
    %cst_41 = arith.constant dense<0.000000e+00> : vector<8x128xf32>
    %147 = tpu.matmul %146, %11, %cst_41 {dimension_numbers = #tpu.dot_dimension_numbers<[1], [0], [0], [1], [0, 0, 1, 1], [], []>} : vector<8x32xbf16>, vector<32x128xbf16>, vector<8x128xf32> -> vector<8x128xf32>
    %148 = arith.addf %145, %147 : vector<8x128xf32>
    %149 = vector.extract_strided_slice %148 {offsets = [0, 0], sizes = [8, 32], strides = [1, 1]} : vector<8x128xf32> to vector<8x32xf32>
    %150 = arith.negf %149 : vector<8x32xf32>
    %151 = math.exp %150 : vector<8x32xf32>
    %cst_42 = arith.constant 1.000000e+00 : f32
    %152 = vector.broadcast %cst_42 : f32 to vector<8x32xf32>
    %153 = arith.addf %152, %151 : vector<8x32xf32>
    %154 = arith.divf %152, %153 : vector<8x32xf32>
    %155 = vector.extract_strided_slice %148 {offsets = [0, 32], sizes = [8, 32], strides = [1, 1]} : vector<8x128xf32> to vector<8x32xf32>
    %156 = arith.negf %155 : vector<8x32xf32>
    %157 = math.exp %156 : vector<8x32xf32>
    %cst_43 = arith.constant 1.000000e+00 : f32
    %158 = vector.broadcast %cst_43 : f32 to vector<8x32xf32>
    %159 = arith.addf %158, %157 : vector<8x32xf32>
    %160 = arith.divf %158, %159 : vector<8x32xf32>
    %161 = vector.extract_strided_slice %148 {offsets = [0, 64], sizes = [8, 32], strides = [1, 1]} : vector<8x128xf32> to vector<8x32xf32>
    %162 = math.tanh %161 : vector<8x32xf32>
    %163 = vector.extract_strided_slice %148 {offsets = [0, 96], sizes = [8, 32], strides = [1, 1]} : vector<8x128xf32> to vector<8x32xf32>
    %164 = arith.negf %163 : vector<8x32xf32>
    %165 = math.exp %164 : vector<8x32xf32>
    %cst_44 = arith.constant 1.000000e+00 : f32
    %166 = vector.broadcast %cst_44 : f32 to vector<8x32xf32>
    %167 = arith.addf %166, %165 : vector<8x32xf32>
    %168 = arith.divf %166, %167 : vector<8x32xf32>
    %169 = arith.mulf %160, %139 : vector<8x32xf32>
    %170 = arith.mulf %154, %162 : vector<8x32xf32>
    %171 = arith.addf %169, %170 : vector<8x32xf32>
    %172 = math.tanh %171 : vector<8x32xf32>
    %173 = arith.mulf %168, %172 : vector<8x32xf32>
    %c5_i32 = arith.constant 5 : i32
    %c8_i32_45 = arith.constant 8 : i32
    %174 = arith.muli %c5_i32, %c8_i32_45 : i32
    %175 = tpu.assume_multiple %174, 8 : i32
    %176 = arith.index_cast %175 : i32 to index
    %c0_46 = arith.constant 0 : index
    %177 = vector.load %arg7[%176, %c0_46] : memref<64x128xf32, #tpu.memory_space<vmem>>, vector<8x128xf32>
    %178 = arith.truncf %173 : vector<8x32xf32> to vector<8x32xbf16>
    %cst_47 = arith.constant dense<0.000000e+00> : vector<8x128xf32>
    %179 = tpu.matmul %178, %11, %cst_47 {dimension_numbers = #tpu.dot_dimension_numbers<[1], [0], [0], [1], [0, 0, 1, 1], [], []>} : vector<8x32xbf16>, vector<32x128xbf16>, vector<8x128xf32> -> vector<8x128xf32>
    %180 = arith.addf %177, %179 : vector<8x128xf32>
    %181 = vector.extract_strided_slice %180 {offsets = [0, 0], sizes = [8, 32], strides = [1, 1]} : vector<8x128xf32> to vector<8x32xf32>
    %182 = arith.negf %181 : vector<8x32xf32>
    %183 = math.exp %182 : vector<8x32xf32>
    %cst_48 = arith.constant 1.000000e+00 : f32
    %184 = vector.broadcast %cst_48 : f32 to vector<8x32xf32>
    %185 = arith.addf %184, %183 : vector<8x32xf32>
    %186 = arith.divf %184, %185 : vector<8x32xf32>
    %187 = vector.extract_strided_slice %180 {offsets = [0, 32], sizes = [8, 32], strides = [1, 1]} : vector<8x128xf32> to vector<8x32xf32>
    %188 = arith.negf %187 : vector<8x32xf32>
    %189 = math.exp %188 : vector<8x32xf32>
    %cst_49 = arith.constant 1.000000e+00 : f32
    %190 = vector.broadcast %cst_49 : f32 to vector<8x32xf32>
    %191 = arith.addf %190, %189 : vector<8x32xf32>
    %192 = arith.divf %190, %191 : vector<8x32xf32>
    %193 = vector.extract_strided_slice %180 {offsets = [0, 64], sizes = [8, 32], strides = [1, 1]} : vector<8x128xf32> to vector<8x32xf32>
    %194 = math.tanh %193 : vector<8x32xf32>
    %195 = vector.extract_strided_slice %180 {offsets = [0, 96], sizes = [8, 32], strides = [1, 1]} : vector<8x128xf32> to vector<8x32xf32>
    %196 = arith.negf %195 : vector<8x32xf32>
    %197 = math.exp %196 : vector<8x32xf32>
    %cst_50 = arith.constant 1.000000e+00 : f32
    %198 = vector.broadcast %cst_50 : f32 to vector<8x32xf32>
    %199 = arith.addf %198, %197 : vector<8x32xf32>
    %200 = arith.divf %198, %199 : vector<8x32xf32>
    %201 = arith.mulf %192, %171 : vector<8x32xf32>
    %202 = arith.mulf %186, %194 : vector<8x32xf32>
    %203 = arith.addf %201, %202 : vector<8x32xf32>
    %204 = math.tanh %203 : vector<8x32xf32>
    %205 = arith.mulf %200, %204 : vector<8x32xf32>
    %c6_i32 = arith.constant 6 : i32
    %c8_i32_51 = arith.constant 8 : i32
    %206 = arith.muli %c6_i32, %c8_i32_51 : i32
    %207 = tpu.assume_multiple %206, 8 : i32
    %208 = arith.index_cast %207 : i32 to index
    %c0_52 = arith.constant 0 : index
    %209 = vector.load %arg7[%208, %c0_52] : memref<64x128xf32, #tpu.memory_space<vmem>>, vector<8x128xf32>
    %210 = arith.truncf %205 : vector<8x32xf32> to vector<8x32xbf16>
    %cst_53 = arith.constant dense<0.000000e+00> : vector<8x128xf32>
    %211 = tpu.matmul %210, %11, %cst_53 {dimension_numbers = #tpu.dot_dimension_numbers<[1], [0], [0], [1], [0, 0, 1, 1], [], []>} : vector<8x32xbf16>, vector<32x128xbf16>, vector<8x128xf32> -> vector<8x128xf32>
    %212 = arith.addf %209, %211 : vector<8x128xf32>
    %213 = vector.extract_strided_slice %212 {offsets = [0, 0], sizes = [8, 32], strides = [1, 1]} : vector<8x128xf32> to vector<8x32xf32>
    %214 = arith.negf %213 : vector<8x32xf32>
    %215 = math.exp %214 : vector<8x32xf32>
    %cst_54 = arith.constant 1.000000e+00 : f32
    %216 = vector.broadcast %cst_54 : f32 to vector<8x32xf32>
    %217 = arith.addf %216, %215 : vector<8x32xf32>
    %218 = arith.divf %216, %217 : vector<8x32xf32>
    %219 = vector.extract_strided_slice %212 {offsets = [0, 32], sizes = [8, 32], strides = [1, 1]} : vector<8x128xf32> to vector<8x32xf32>
    %220 = arith.negf %219 : vector<8x32xf32>
    %221 = math.exp %220 : vector<8x32xf32>
    %cst_55 = arith.constant 1.000000e+00 : f32
    %222 = vector.broadcast %cst_55 : f32 to vector<8x32xf32>
    %223 = arith.addf %222, %221 : vector<8x32xf32>
    %224 = arith.divf %222, %223 : vector<8x32xf32>
    %225 = vector.extract_strided_slice %212 {offsets = [0, 64], sizes = [8, 32], strides = [1, 1]} : vector<8x128xf32> to vector<8x32xf32>
    %226 = math.tanh %225 : vector<8x32xf32>
    %227 = vector.extract_strided_slice %212 {offsets = [0, 96], sizes = [8, 32], strides = [1, 1]} : vector<8x128xf32> to vector<8x32xf32>
    %228 = arith.negf %227 : vector<8x32xf32>
    %229 = math.exp %228 : vector<8x32xf32>
    %cst_56 = arith.constant 1.000000e+00 : f32
    %230 = vector.broadcast %cst_56 : f32 to vector<8x32xf32>
    %231 = arith.addf %230, %229 : vector<8x32xf32>
    %232 = arith.divf %230, %231 : vector<8x32xf32>
    %233 = arith.mulf %224, %203 : vector<8x32xf32>
    %234 = arith.mulf %218, %226 : vector<8x32xf32>
    %235 = arith.addf %233, %234 : vector<8x32xf32>
    %236 = math.tanh %235 : vector<8x32xf32>
    %237 = arith.mulf %232, %236 : vector<8x32xf32>
    %c7_i32 = arith.constant 7 : i32
    %c8_i32_57 = arith.constant 8 : i32
    %238 = arith.muli %c7_i32, %c8_i32_57 : i32
    %239 = tpu.assume_multiple %238, 8 : i32
    %240 = arith.index_cast %239 : i32 to index
    %c0_58 = arith.constant 0 : index
    %241 = vector.load %arg7[%240, %c0_58] : memref<64x128xf32, #tpu.memory_space<vmem>>, vector<8x128xf32>
    %242 = arith.truncf %237 : vector<8x32xf32> to vector<8x32xbf16>
    %cst_59 = arith.constant dense<0.000000e+00> : vector<8x128xf32>
    %243 = tpu.matmul %242, %11, %cst_59 {dimension_numbers = #tpu.dot_dimension_numbers<[1], [0], [0], [1], [0, 0, 1, 1], [], []>} : vector<8x32xbf16>, vector<32x128xbf16>, vector<8x128xf32> -> vector<8x128xf32>
    %244 = arith.addf %241, %243 : vector<8x128xf32>
    %245 = vector.extract_strided_slice %244 {offsets = [0, 0], sizes = [8, 32], strides = [1, 1]} : vector<8x128xf32> to vector<8x32xf32>
    %246 = arith.negf %245 : vector<8x32xf32>
    %247 = math.exp %246 : vector<8x32xf32>
    %cst_60 = arith.constant 1.000000e+00 : f32
    %248 = vector.broadcast %cst_60 : f32 to vector<8x32xf32>
    %249 = arith.addf %248, %247 : vector<8x32xf32>
    %250 = arith.divf %248, %249 : vector<8x32xf32>
    %251 = vector.extract_strided_slice %244 {offsets = [0, 32], sizes = [8, 32], strides = [1, 1]} : vector<8x128xf32> to vector<8x32xf32>
    %252 = arith.negf %251 : vector<8x32xf32>
    %253 = math.exp %252 : vector<8x32xf32>
    %cst_61 = arith.constant 1.000000e+00 : f32
    %254 = vector.broadcast %cst_61 : f32 to vector<8x32xf32>
    %255 = arith.addf %254, %253 : vector<8x32xf32>
    %256 = arith.divf %254, %255 : vector<8x32xf32>
    %257 = vector.extract_strided_slice %244 {offsets = [0, 64], sizes = [8, 32], strides = [1, 1]} : vector<8x128xf32> to vector<8x32xf32>
    %258 = math.tanh %257 : vector<8x32xf32>
    %259 = vector.extract_strided_slice %244 {offsets = [0, 96], sizes = [8, 32], strides = [1, 1]} : vector<8x128xf32> to vector<8x32xf32>
    %260 = arith.negf %259 : vector<8x32xf32>
    %261 = math.exp %260 : vector<8x32xf32>
    %cst_62 = arith.constant 1.000000e+00 : f32
    %262 = vector.broadcast %cst_62 : f32 to vector<8x32xf32>
    %263 = arith.addf %262, %261 : vector<8x32xf32>
    %264 = arith.divf %262, %263 : vector<8x32xf32>
    %265 = arith.mulf %256, %235 : vector<8x32xf32>
    %266 = arith.mulf %250, %258 : vector<8x32xf32>
    %267 = arith.addf %265, %266 : vector<8x32xf32>
    %268 = math.tanh %267 : vector<8x32xf32>
    %269 = arith.mulf %264, %268 : vector<8x32xf32>
    %c8_i32_63 = arith.constant 8 : i32
    %c0_64 = arith.constant 0 : index
    %c0_65 = arith.constant 0 : index
    %270 = vector.load %arg8[%c0_64, %c0_65] : memref<8x32xf32, #tpu.memory_space<vmem>>, vector<8x32xf32>
    tpu.vector_store %arg8[%c0_64, %c0_65], %269 {strides = array<i32>} : memref<8x32xf32, #tpu.memory_space<vmem>>, vector<8x32xf32>,
    %c0_66 = arith.constant 0 : index
    %c0_67 = arith.constant 0 : index
    %271 = vector.load %arg9[%c0_66, %c0_67] : memref<8x32xf32, #tpu.memory_space<vmem>>, vector<8x32xf32>
    tpu.vector_store %arg9[%c0_66, %c0_67], %267 {strides = array<i32>} : memref<8x32xf32, #tpu.memory_space<vmem>>, vector<8x32xf32>,
    %c0_i32_68 = arith.constant 0 : i32
    %272 = arith.cmpi eq, %arg1, %c0_i32_68 : i32
    %273 = arith.extui %272 : i1 to i32
    %c0_i32_69 = arith.constant 0 : i32
    %274 = arith.cmpi ne, %273, %c0_i32_69 : i32
    scf.if %274 {
      %c0_70 = arith.constant 0 : index
      %c0_71 = arith.constant 0 : index
      %275 = vector.load %arg6[%c0_70, %c0_71] : memref<8x32xf32, #tpu.memory_space<vmem>>, vector<8x32xf32>
      tpu.vector_store %arg6[%c0_70, %c0_71], %269 {strides = array<i32>} : memref<8x32xf32, #tpu.memory_space<vmem>>, vector<8x32xf32>,
    } else {
    }
    return
  }
  func.func @transform_0(%arg0: i32, %arg1: i32) -> (i32, i32, i32) {
    %c0_i32 = arith.constant 0 : i32
    %c0_i32_0 = arith.constant 0 : i32
    return %arg1, %arg0, %c0_i32 : i32, i32, i32
  }
  func.func @transform_1(%arg0: i32, %arg1: i32) -> (i32, i32) {
    %c0_i32 = arith.constant 0 : i32
    %c0_i32_0 = arith.constant 0 : i32
    %c0_i32_1 = arith.constant 0 : i32
    return %c0_i32, %c0_i32_0 : i32, i32
  }
  func.func @transform_2(%arg0: i32, %arg1: i32) -> (i32, i32) {
    %c0_i32 = arith.constant 0 : i32
    %c0_i32_0 = arith.constant 0 : i32
    %c0_i32_1 = arith.constant 0 : i32
    return %c0_i32, %c0_i32_0 : i32, i32
  }
  func.func @transform_3(%arg0: i32, %arg1: i32) -> (i32, i32) {
    %c0_i32 = arith.constant 0 : i32
    %c0_i32_0 = arith.constant 0 : i32
    %c0_i32_1 = arith.constant 0 : i32
    return %c0_i32, %c0_i32_0 : i32, i32
  }
  func.func @transform_4(%arg0: i32, %arg1: i32) -> (i32, i32) {
    %c0_i32 = arith.constant 0 : i32
    %c0_i32_0 = arith.constant 0 : i32
    return %arg0, %c0_i32 : i32, i32
  }
}

</mosaic_0001>

<llo_original>
// kernel: tpu_custom_call.1
$region0: #{tpu_custom_call.1}
  #allocation0 [shape = 'u32[]', space=smem, size = 0x4, offset = 0x4, fixed_abs, tag = 'smem constant byte address 0x4 - core index']
  #allocation1 [shape = 'u32[72,128]{1,0:T(1,128)}', space=vmem, size = 0x9000, scoped, tag = 'internal scratch']
  #allocation2 [shape = 'f32[64,128]{1,0:T(8,128)}', space=vmem, size = 0x8000, scoped, tag = 'scratch operand']
  #allocation3 [shape = 'f32[8,32]{1,0:T(8,128)}', space=vmem, size = 0x1000, scoped, tag = 'scratch operand']
  #allocation4 [shape = 'f32[8,32]{1,0:T(8,128)}', space=vmem, size = 0x1000, scoped, tag = 'scratch operand']
  %s0 = inlined_call_operand.hbm [shape: f32[8,8,8], index: 0, kind: input, shape index: {}]
  %s1 = inlined_call_operand.hbm [shape: f32[8,128], index: 1, kind: input, shape index: {}]
  %s2 = inlined_call_operand.hbm [shape: bf16[32,128], index: 2, kind: input, shape index: {}]
  %s3 = inlined_call_operand.vmem [shape: f32[1,128], index: 3, kind: input, shape index: {}]
  %s4 = inlined_call_operand.hbm [shape: f32[8,32], index: 4, kind: output, shape index: {}]
  %s5 = sld [smem:[#allocation0]]
  $region46: #{tpu_custom_call.1} parent=0
    _
  %s7 = ssub.s32 1, %s5
  %s8 = scalar_select 0, %s7, %s5
  $region1: #{tpu_custom_call.1} parent=0
    #allocation5 [shape = 'u8[32768]{0}', space=vmem, size = 0x8000, scoped, tag = 'input window, operand 0, single buffered']
    #allocation6 [shape = 's32[1]{0}', space=sflag, size = 0x4, scoped, tag = 'scoped memory for tpu_custom_call.1']
    #allocation7 [shape = 's32[1]{0}', space=sflag, size = 0x4, scoped, tag = 'scoped memory for tpu_custom_call.1']
    #allocation8 [shape = 'u8[4096]{0}', space=vmem, size = 0x1000, scoped, tag = 'input window, operand 1, single buffered']
    #allocation9 [shape = 's32[1]{0}', space=sflag, size = 0x4, scoped, tag = 'scoped memory for tpu_custom_call.1']
    #allocation10 [shape = 'u8[8192]{0}', space=vmem, size = 0x2000, scoped, tag = 'input window, operand 2, single buffered']
    #allocation11 [shape = 'u8[4096]{0}', space=vmem, size = 0x1000, scoped, tag = 'output window, operand 0, single buffered']
    %9 = vsyncpa [#allocation6], 0
    %10 = vsyncpa [#allocation9], 0
    %11 = vsyncpa [#allocation7], 0
    // Predicated region
    $region2: #{tpu_custom_call.1} parent=1 // pred_check
      _
    $region3: #{tpu_custom_call.1} parent=1 // pred_check_branch
      %13 = sbr.rel (0) target = $region5
    $region4: #{tpu_custom_call.1} parent=1 // pred_region
      %15 = vsyncadd [#allocation6], 0
      %s16 = sshll.u32 %s0, 4
      %s17 = int_to_ptr.hbm [resolvable:$true] %s16
      %s18 = sshll.u32 [#allocation5], 4
      %s19 = int_to_ptr.vmem [resolvable:$true] %s18
      %24 = dma.hbm_to_vmem [thread:$0]  %s17, 1024, %s19, [#allocation6], 128, 128, 8
    $region5: #{tpu_custom_call.1} parent=1 // pred_fallthru
      _
    // Predicated region
    $region6: #{tpu_custom_call.1} parent=1 // pred_check
      _
    $region7: #{tpu_custom_call.1} parent=1 // pred_check_branch
      %26 = sbr.rel (0) target = $region9
    $region8: #{tpu_custom_call.1} parent=1 // pred_region
      %28 = vsyncadd [#allocation9], 0
      %s30 = sshll.u32 %s1, 4
      %s31 = int_to_ptr.hbm [resolvable:$true] %s30
      %s32 = sshll.u32 [#allocation8], 4
      %s33 = int_to_ptr.vmem [resolvable:$true] %s32
      %35 = dma.hbm_to_vmem [thread:$0]  %s31, 128, %s33, [#allocation9]
    $region9: #{tpu_custom_call.1} parent=1 // pred_fallthru
      _
    // Predicated region
    $region10: #{tpu_custom_call.1} parent=1 // pred_check
      _
    $region11: #{tpu_custom_call.1} parent=1 // pred_check_branch
      %37 = sbr.rel (0) target = $region13
    $region12: #{tpu_custom_call.1} parent=1 // pred_region
      %39 = vsyncadd [#allocation9], 0
      %s40 = sshll.u32 %s2, 4
      %s41 = int_to_ptr.hbm [resolvable:$true] %s40
      %s42 = sshll.u32 [#allocation10], 4
      %s43 = int_to_ptr.vmem [resolvable:$true] %s42
      %48 = dma.hbm_to_vmem [thread:$0]  %s41, 256, %s43, [#allocation9], 64, 64, 4
    $region13: #{tpu_custom_call.1} parent=1 // pred_fallthru
      _
    // Predicated region
    $region14: #{tpu_custom_call.1} parent=1 // pred_check
      _
    $region15: #{tpu_custom_call.1} parent=1 // pred_check_branch
      %50 = sbr.rel (0) target = $region17
    $region16: #{tpu_custom_call.1} parent=1 // pred_region
      _
    $region17: #{tpu_custom_call.1} parent=1 // pred_fallthru
      _
    // Predicated region
    $region18: #{tpu_custom_call.1} parent=1 // pred_check
      _
    $region19: #{tpu_custom_call.1} parent=1 // pred_check_branch
      %52 = sbr.rel (0) target = $region21
    $region20: #{tpu_custom_call.1} parent=1 // pred_region
      %54 = dma.done [#allocation6], 1024
    $region21: #{tpu_custom_call.1} parent=1 // pred_fallthru
      _
    // Predicated region
    $region22: #{tpu_custom_call.1} parent=1 // pred_check
      _
    $region23: #{tpu_custom_call.1} parent=1 // pred_check_branch
      %56 = sbr.rel (0) target = $region25
    $region24: #{tpu_custom_call.1} parent=1 // pred_region
      %58 = dma.done [#allocation9], 128
    $region25: #{tpu_custom_call.1} parent=1 // pred_fallthru
      _
    // Predicated region
    $region26: #{tpu_custom_call.1} parent=1 // pred_check
      _
    $region27: #{tpu_custom_call.1} parent=1 // pred_check_branch
      %60 = sbr.rel (0) target = $region29
    $region28: #{tpu_custom_call.1} parent=1 // pred_region
      %62 = dma.done [#allocation9], 256
    $region29: #{tpu_custom_call.1} parent=1 // pred_fallthru
      _
    %p64 = scmp.eq.s32.totalorder 0, 0
    // Predicated region
    $region30: #{tpu_custom_call.1} parent=1 // pred_check
      %p65 = pneg %p64
    $region31: #{tpu_custom_call.1} parent=1 // pred_check_branch
      %67 = sbr.rel (%p65) target = $region33
    $region32: #{tpu_custom_call.1} parent=1 // pred_region
      %vm68 = vcmask 261120
      %69 = vst.msk [vmem:[#allocation3] sm:$0xff] %vm68, 0.0
      %70 = vst.msk [vmem:[#allocation4] sm:$0xff] %vm68, 0.0
    $region33: #{tpu_custom_call.1} parent=1 // pred_fallthru
      _
    %v71 = vld [vmem:[#allocation5] sm:$0xff]
    %v72 = vld [vmem:[#allocation5 + $0x8] sm:$0xff]
    %v73 = vld [vmem:[#allocation5 + $0x10] sm:$0xff]
    %v74 = vld [vmem:[#allocation5 + $0x18] sm:$0xff]
    %v75 = vld [vmem:[#allocation5 + $0x20] sm:$0xff]
    %v76 = vld [vmem:[#allocation5 + $0x28] sm:$0xff]
    %v77 = vld [vmem:[#allocation5 + $0x30] sm:$0xff]
    %v78 = vld [vmem:[#allocation5 + $0x38] sm:$0xff]
    %v79 = vld [vmem:[#allocation8] sm:$0xff]
    %v80 = vld [vmem:[%s3] sm:$0x1]
    %v82 = vperm.slane %v80, 0
    %vm84 = vcmask 64512
    %v86 = vsel %vm84, %v71, 0
    %v89 = vsel %vm84, %v72, 0
    %v92 = vsel %vm84, %v73, 0
    %v95 = vsel %vm84, %v74, 0
    %v98 = vsel %vm84, %v75, 0
    %v101 = vsel %vm84, %v76, 0
    %v104 = vsel %vm84, %v77, 0
    %v107 = vsel %vm84, %v78, 0
    %109 = vmatpush.msra.mxu0 0.0
    %110 = vmatpush.msra.mxu0 0.0
    %111 = vmatpush.msra.mxu0 0.0
    %112 = vmatpush.msra.mxu0 0.0
    %113 = vmatpush.msra.mxu0 0.0
    %114 = vmatpush.msra.mxu0 0.0
    %115 = vmatpush.msra.mxu0 0.0
    %116 = vmatpush.msra.mxu0 0.0
    %117 = vmatpush.msra.mxu0 0.0
    %118 = vmatpush.msra.mxu0 0.0
    %119 = vmatpush.msra.mxu0 0.0
    %120 = vmatpush.msra.mxu0 0.0
    %121 = vmatpush.msra.mxu0 0.0
    %122 = vmatpush.msra.mxu0 0.0
    %123 = vmatpush.msra.mxu0 0.0
    %124 = vmatpush.msra.mxu0 %v79
    %125 = vmatmul.f32.gmra.mxu0 %v86
    %v126 = vpop.f32.mrf.mxu0
    %v127 = vadd.f32 %v82, %v126
    %128 = vmatmul.f32.gmra.mxu0 %v89
    %v129 = vpop.f32.mrf.mxu0
    %v130 = vadd.f32 %v82, %v129
    %131 = vmatmul.f32.gmra.mxu0 %v92
    %v132 = vpop.f32.mrf.mxu0
    %v133 = vadd.f32 %v82, %v132
    %134 = vmatmul.f32.gmra.mxu0 %v95
    %v135 = vpop.f32.mrf.mxu0
    %v136 = vadd.f32 %v82, %v135
    %137 = vmatmul.f32.gmra.mxu0 %v98
    %v138 = vpop.f32.mrf.mxu0
    %v139 = vadd.f32 %v82, %v138
    %140 = vmatmul.f32.gmra.mxu0 %v101
    %v141 = vpop.f32.mrf.mxu0
    %v142 = vadd.f32 %v82, %v141
    %143 = vmatmul.f32.gmra.mxu0 %v104
    %v144 = vpop.f32.mrf.mxu0
    %v145 = vadd.f32 %v82, %v144
    %146 = vmatmul.f32.gmra.mxu0 %v107
    %v147 = vpop.f32.mrf.mxu0
    %v148 = vadd.f32 %v82, %v147
    %149 = vdwg.mxu0
    %150 = vst [vmem:[#allocation2] sm:$0xff] %v127
    %151 = vst [vmem:[#allocation2 + $0x8] sm:$0xff] %v130
    %152 = vst [vmem:[#allocation2 + $0x10] sm:$0xff] %v133
    %153 = vst [vmem:[#allocation2 + $0x18] sm:$0xff] %v136
    %154 = vst [vmem:[#allocation2 + $0x20] sm:$0xff] %v139
    %155 = vst [vmem:[#allocation2 + $0x28] sm:$0xff] %v142
    %156 = vst [vmem:[#allocation2 + $0x30] sm:$0xff] %v145
    %157 = vst [vmem:[#allocation2 + $0x38] sm:$0xff] %v148
    %v158 = vld [vmem:[#allocation10] sm:$0xf]
    %v159 = vld [vmem:[#allocation10 + $0x4] sm:$0xf]
    %v160 = vld [vmem:[#allocation10 + $0x8] sm:$0xf]
    %v161 = vld [vmem:[#allocation10 + $0xc] sm:$0xf]
    %v162 = vld [vmem:[#allocation3] sm:$0xff]
    %v163 = vld [vmem:[#allocation4] sm:$0xff]
    %v164 = vld [vmem:[#allocation2] sm:$0xff]
    %v165 = vpack.c.bf16 %v162, %v162
    %v170 = vunpack.c.l.b16 %v158
    %v171 = vunpack.c.l.b16 %v159
    %v172 = vunpack.c.l.b16 %v160
    %v173 = vunpack.c.l.b16 %v161
    %v174 = vpack.c.b16 %v171, %v170
    %v175 = vpack.c.b16 %v173, %v172
    %vm178 = vcmask 261120
    %v180 = vsel %vm178, %v165, 0
    %182 = vmatpush.bf16.msra.mxu0 0
    %183 = vmatpush.bf16.msra.mxu0 0
    %184 = vmatpush.bf16.msra.mxu0 0
    %185 = vmatpush.bf16.msra.mxu0 0
    %186 = vmatpush.bf16.msra.mxu0 0
    %187 = vmatpush.bf16.msra.mxu0 0
    %188 = vmatpush.bf16.msra.mxu0 %v175
    %189 = vmatpush.bf16.msra.mxu0 %v174
    %190 = vmatmul.bf16.gmra.mxu0 %v180
    %v191 = vpop.f32.mrf.mxu0
    %v192 = vadd.f32 0.0, %v191
    %v193 = vpop.f32.mrf.mxu0
    %194 = vdwg.mxu0
    %v195 = vadd.f32 %v164, %v192
    %v196 = vxor.u32 %v195, 2147483648
    %v197 = vmul.f32 %v196, 1.442695
    %v198 = vpow.pop %v197
    %v199 = vadd.f32 %v198, 1.0
    %v200 = vrcp.pop %v199
    %v201 = vmul.f32 %v199, %v200
    %v202 = vsub.f32 1.0, %v201
    %v203 = vmul.f32 %v200, %v202
    %v204 = vadd.f32 %v200, %v203
    %vm205 = vweird.f32 %v199
    %vm206 = vweird.f32 %v200
    %vm207 = vmor %vm205, %vm206
    %v208 = vsel %vm207, %v200, %v204
    %v209 = vand.u32 2147483647, %v199
    %vm210 = vcmp.eq.f32.partialorder %v209, 8.507059e+37
    %v211 = vand.u32 %v199, 2147483648
    %v212 = vor.u32 1.1754944e-38, %v211
    %v213 = vsel %vm210, %v212, %v208
    %v214 = vmul.f32 1.0, %v213
    %v215 = vtanh.pop %v195
    %217 = vrot.lane.b32.xlu0 %v163, 32
    %v218 = vpop.permute.xlu0 %217
    %v220 = vmul.f32 %v214, %v218
    %222 = vrot.lane.b32.xlu0 %v215, 64
    %v223 = vpop.permute.xlu0 %222
    %v225 = vmul.f32 %v214, %v223
    %227 = vrot.lane.b32.xlu0 %v225, 32
    %v228 = vpop.permute.xlu0 %227
    %v230 = vadd.f32 %v220, %v228
    %v231 = vtanh.pop %v230
    %233 = vrot.lane.b32.xlu0 %v231, 64
    %v234 = vpop.permute.xlu0 %233
    %v236 = vmul.f32 %v214, %v234
    %s237 = scalar_lea.vmem [#allocation2], 8
    %v238 = vld [vmem:[%s237] sm:$0xff]
    %v239 = vpack.c.bf16 %v236, %v236
    %241 = vrot.lane.b32.xlu0 %v239, 32
    %v242 = vpop.permute.xlu0 %241
    %v244 = vsel %vm178, %v242, 0
    %246 = vmatpush.bf16.msra.mxu0 0
    %247 = vmatpush.bf16.msra.mxu0 0
    %248 = vmatpush.bf16.msra.mxu0 0
    %249 = vmatpush.bf16.msra.mxu0 0
    %250 = vmatpush.bf16.msra.mxu0 0
    %251 = vmatpush.bf16.msra.mxu0 0
    %252 = vmatpush.bf16.msra.mxu0 %v175
    %253 = vmatpush.bf16.msra.mxu0 %v174
    %254 = vmatmul.bf16.gmra.mxu0 %v244
    %v255 = vpop.f32.mrf.mxu0
    %v256 = vadd.f32 0.0, %v255
    %v257 = vpop.f32.mrf.mxu0
    %258 = vdwg.mxu0
    %v259 = vadd.f32 %v238, %v256
    %v260 = vxor.u32 %v259, 2147483648
    %v261 = vmul.f32 %v260, 1.442695
    %v262 = vpow.pop %v261
    %v263 = vadd.f32 %v262, 1.0
    %v264 = vrcp.pop %v263
    %v265 = vmul.f32 %v263, %v264
    %v266 = vsub.f32 1.0, %v265
    %v267 = vmul.f32 %v264, %v266
    %v268 = vadd.f32 %v264, %v267
    %vm269 = vweird.f32 %v263
    %vm270 = vweird.f32 %v264
    %vm271 = vmor %vm269, %vm270
    %v272 = vsel %vm271, %v264, %v268
    %v273 = vand.u32 2147483647, %v263
    %vm274 = vcmp.eq.f32.partialorder %v273, 8.507059e+37
    %v275 = vand.u32 %v263, 2147483648
    %v276 = vor.u32 1.1754944e-38, %v275
    %v277 = vsel %vm274, %v276, %v272
    %v278 = vmul.f32 1.0, %v277
    %v279 = vtanh.pop %v259
    %v280 = vmul.f32 %v278, %v230
    %282 = vrot.lane.b32.xlu0 %v279, 64
    %v283 = vpop.permute.xlu0 %282
    %v285 = vmul.f32 %v278, %v283
    %287 = vrot.lane.b32.xlu0 %v285, 32
    %v288 = vpop.permute.xlu0 %287
    %v290 = vadd.f32 %v280, %v288
    %v291 = vtanh.pop %v290
    %293 = vrot.lane.b32.xlu0 %v291, 64
    %v294 = vpop.permute.xlu0 %293
    %v296 = vmul.f32 %v278, %v294
    %s297 = scalar_lea.vmem [#allocation2], 16
    %v298 = vld [vmem:[%s297] sm:$0xff]
    %v299 = vpack.c.bf16 %v296, %v296
    %301 = vrot.lane.b32.xlu0 %v299, 32
    %v302 = vpop.permute.xlu0 %301
    %v304 = vsel %vm178, %v302, 0
    %306 = vmatpush.bf16.msra.mxu0 0
    %307 = vmatpush.bf16.msra.mxu0 0
    %308 = vmatpush.bf16.msra.mxu0 0
    %309 = vmatpush.bf16.msra.mxu0 0
    %310 = vmatpush.bf16.msra.mxu0 0
    %311 = vmatpush.bf16.msra.mxu0 0
    %312 = vmatpush.bf16.msra.mxu0 %v175
    %313 = vmatpush.bf16.msra.mxu0 %v174
    %314 = vmatmul.bf16.gmra.mxu0 %v304
    %v315 = vpop.f32.mrf.mxu0
    %v316 = vadd.f32 0.0, %v315
    %v317 = vpop.f32.mrf.mxu0
    %318 = vdwg.mxu0
    %v319 = vadd.f32 %v298, %v316
    %v320 = vxor.u32 %v319, 2147483648
    %v321 = vmul.f32 %v320, 1.442695
    %v322 = vpow.pop %v321
    %v323 = vadd.f32 %v322, 1.0
    %v324 = vrcp.pop %v323
    %v325 = vmul.f32 %v323, %v324
    %v326 = vsub.f32 1.0, %v325
    %v327 = vmul.f32 %v324, %v326
    %v328 = vadd.f32 %v324, %v327
    %vm329 = vweird.f32 %v323
    %vm330 = vweird.f32 %v324
    %vm331 = vmor %vm329, %vm330
    %v332 = vsel %vm331, %v324, %v328
    %v333 = vand.u32 2147483647, %v323
    %vm334 = vcmp.eq.f32.partialorder %v333, 8.507059e+37
    %v335 = vand.u32 %v323, 2147483648
    %v336 = vor.u32 1.1754944e-38, %v335
    %v337 = vsel %vm334, %v336, %v332
    %v338 = vmul.f32 1.0, %v337
    %v339 = vtanh.pop %v319
    %v340 = vmul.f32 %v338, %v290
    %342 = vrot.lane.b32.xlu0 %v339, 64
    %v343 = vpop.permute.xlu0 %342
    %v345 = vmul.f32 %v338, %v343
    %347 = vrot.lane.b32.xlu0 %v345, 32
    %v348 = vpop.permute.xlu0 %347
    %v350 = vadd.f32 %v340, %v348
    %v351 = vtanh.pop %v350
    %353 = vrot.lane.b32.xlu0 %v351, 64
    %v354 = vpop.permute.xlu0 %353
    %v356 = vmul.f32 %v338, %v354
    %s357 = scalar_lea.vmem [#allocation2], 24
    %v358 = vld [vmem:[%s357] sm:$0xff]
    %v359 = vpack.c.bf16 %v356, %v356
    %361 = vrot.lane.b32.xlu0 %v359, 32
    %v362 = vpop.permute.xlu0 %361
    %v364 = vsel %vm178, %v362, 0
    %366 = vmatpush.bf16.msra.mxu0 0
    %367 = vmatpush.bf16.msra.mxu0 0
    %368 = vmatpush.bf16.msra.mxu0 0
    %369 = vmatpush.bf16.msra.mxu0 0
    %370 = vmatpush.bf16.msra.mxu0 0
    %371 = vmatpush.bf16.msra.mxu0 0
    %372 = vmatpush.bf16.msra.mxu0 %v175
    %373 = vmatpush.bf16.msra.mxu0 %v174
    %374 = vmatmul.bf16.gmra.mxu0 %v364
    %v375 = vpop.f32.mrf.mxu0
    %v376 = vadd.f32 0.0, %v375
    %v377 = vpop.f32.mrf.mxu0
    %378 = vdwg.mxu0
    %v379 = vadd.f32 %v358, %v376
    %v380 = vxor.u32 %v379, 2147483648
    %v381 = vmul.f32 %v380, 1.442695
    %v382 = vpow.pop %v381
    %v383 = vadd.f32 %v382, 1.0
    %v384 = vrcp.pop %v383
    %v385 = vmul.f32 %v383, %v384
    %v386 = vsub.f32 1.0, %v385
    %v387 = vmul.f32 %v384, %v386
    %v388 = vadd.f32 %v384, %v387
    %vm389 = vweird.f32 %v383
    %vm390 = vweird.f32 %v384
    %vm391 = vmor %vm389, %vm390
    %v392 = vsel %vm391, %v384, %v388
    %v393 = vand.u32 2147483647, %v383
    %vm394 = vcmp.eq.f32.partialorder %v393, 8.507059e+37
    %v395 = vand.u32 %v383, 2147483648
    %v396 = vor.u32 1.1754944e-38, %v395
    %v397 = vsel %vm394, %v396, %v392
    %v398 = vmul.f32 1.0, %v397
    %v399 = vtanh.pop %v379
    %v400 = vmul.f32 %v398, %v350
    %402 = vrot.lane.b32.xlu0 %v399, 64
    %v403 = vpop.permute.xlu0 %402
    %v405 = vmul.f32 %v398, %v403
    %407 = vrot.lane.b32.xlu0 %v405, 32
    %v408 = vpop.permute.xlu0 %407
    %v410 = vadd.f32 %v400, %v408
    %v411 = vtanh.pop %v410
    %413 = vrot.lane.b32.xlu0 %v411, 64
    %v414 = vpop.permute.xlu0 %413
    %v416 = vmul.f32 %v398, %v414
    %s417 = scalar_lea.vmem [#allocation2], 32
    %v418 = vld [vmem:[%s417] sm:$0xff]
    %v419 = vpack.c.bf16 %v416, %v416
    %421 = vrot.lane.b32.xlu0 %v419, 32
    %v422 = vpop.permute.xlu0 %421
    %v424 = vsel %vm178, %v422, 0
    %426 = vmatpush.bf16.msra.mxu0 0
    %427 = vmatpush.bf16.msra.mxu0 0
    %428 = vmatpush.bf16.msra.mxu0 0
    %429 = vmatpush.bf16.msra.mxu0 0
    %430 = vmatpush.bf16.msra.mxu0 0
    %431 = vmatpush.bf16.msra.mxu0 0
    %432 = vmatpush.bf16.msra.mxu0 %v175
    %433 = vmatpush.bf16.msra.mxu0 %v174
    %434 = vmatmul.bf16.gmra.mxu0 %v424
    %v435 = vpop.f32.mrf.mxu0
    %v436 = vadd.f32 0.0, %v435
    %v437 = vpop.f32.mrf.mxu0
    %438 = vdwg.mxu0
    %v439 = vadd.f32 %v418, %v436
    %v440 = vxor.u32 %v439, 2147483648
    %v441 = vmul.f32 %v440, 1.442695
    %v442 = vpow.pop %v441
    %v443 = vadd.f32 %v442, 1.0
    %v444 = vrcp.pop %v443
    %v445 = vmul.f32 %v443, %v444
    %v446 = vsub.f32 1.0, %v445
    %v447 = vmul.f32 %v444, %v446
    %v448 = vadd.f32 %v444, %v447
    %vm449 = vweird.f32 %v443
    %vm450 = vweird.f32 %v444
    %vm451 = vmor %vm449, %vm450
    %v452 = vsel %vm451, %v444, %v448
    %v453 = vand.u32 2147483647, %v443
    %vm454 = vcmp.eq.f32.partialorder %v453, 8.507059e+37
    %v455 = vand.u32 %v443, 2147483648
    %v456 = vor.u32 1.1754944e-38, %v455
    %v457 = vsel %vm454, %v456, %v452
    %v458 = vmul.f32 1.0, %v457
    %v459 = vtanh.pop %v439
    %v460 = vmul.f32 %v458, %v410
    %462 = vrot.lane.b32.xlu0 %v459, 64
    %v463 = vpop.permute.xlu0 %462
    %v465 = vmul.f32 %v458, %v463
    %467 = vrot.lane.b32.xlu0 %v465, 32
    %v468 = vpop.permute.xlu0 %467
    %v470 = vadd.f32 %v460, %v468
    %v471 = vtanh.pop %v470
    %473 = vrot.lane.b32.xlu0 %v471, 64
    %v474 = vpop.permute.xlu0 %473
    %v476 = vmul.f32 %v458, %v474
    %s477 = scalar_lea.vmem [#allocation2], 40
    %v478 = vld [vmem:[%s477] sm:$0xff]
    %v479 = vpack.c.bf16 %v476, %v476
    %481 = vrot.lane.b32.xlu0 %v479, 32
    %v482 = vpop.permute.xlu0 %481
    %v484 = vsel %vm178, %v482, 0
    %486 = vmatpush.bf16.msra.mxu0 0
    %487 = vmatpush.bf16.msra.mxu0 0
    %488 = vmatpush.bf16.msra.mxu0 0
    %489 = vmatpush.bf16.msra.mxu0 0
    %490 = vmatpush.bf16.msra.mxu0 0
    %491 = vmatpush.bf16.msra.mxu0 0
    %492 = vmatpush.bf16.msra.mxu0 %v175
    %493 = vmatpush.bf16.msra.mxu0 %v174
    %494 = vmatmul.bf16.gmra.mxu0 %v484
    %v495 = vpop.f32.mrf.mxu0
    %v496 = vadd.f32 0.0, %v495
    %v497 = vpop.f32.mrf.mxu0
    %498 = vdwg.mxu0
    %v499 = vadd.f32 %v478, %v496
    %v500 = vxor.u32 %v499, 2147483648
    %v501 = vmul.f32 %v500, 1.442695
    %v502 = vpow.pop %v501
    %v503 = vadd.f32 %v502, 1.0
    %v504 = vrcp.pop %v503
    %v505 = vmul.f32 %v503, %v504
    %v506 = vsub.f32 1.0, %v505
    %v507 = vmul.f32 %v504, %v506
    %v508 = vadd.f32 %v504, %v507
    %vm509 = vweird.f32 %v503
    %vm510 = vweird.f32 %v504
    %vm511 = vmor %vm509, %vm510
    %v512 = vsel %vm511, %v504, %v508
    %v513 = vand.u32 2147483647, %v503
    %vm514 = vcmp.eq.f32.partialorder %v513, 8.507059e+37
    %v515 = vand.u32 %v503, 2147483648
    %v516 = vor.u32 1.1754944e-38, %v515
    %v517 = vsel %vm514, %v516, %v512
    %v518 = vmul.f32 1.0, %v517
    %v519 = vtanh.pop %v499
    %v520 = vmul.f32 %v518, %v470
    %522 = vrot.lane.b32.xlu0 %v519, 64
    %v523 = vpop.permute.xlu0 %522
    %v525 = vmul.f32 %v518, %v523
    %527 = vrot.lane.b32.xlu0 %v525, 32
    %v528 = vpop.permute.xlu0 %527
    %v530 = vadd.f32 %v520, %v528
    %v531 = vtanh.pop %v530
    %533 = vrot.lane.b32.xlu0 %v531, 64
    %v534 = vpop.permute.xlu0 %533
    %v536 = vmul.f32 %v518, %v534
    %s537 = scalar_lea.vmem [#allocation2], 48
    %v538 = vld [vmem:[%s537] sm:$0xff]
    %v539 = vpack.c.bf16 %v536, %v536
    %541 = vrot.lane.b32.xlu0 %v539, 32
    %v542 = vpop.permute.xlu0 %541
    %v544 = vsel %vm178, %v542, 0
    %546 = vmatpush.bf16.msra.mxu0 0
    %547 = vmatpush.bf16.msra.mxu0 0
    %548 = vmatpush.bf16.msra.mxu0 0
    %549 = vmatpush.bf16.msra.mxu0 0
    %550 = vmatpush.bf16.msra.mxu0 0
    %551 = vmatpush.bf16.msra.mxu0 0
    %552 = vmatpush.bf16.msra.mxu0 %v175
    %553 = vmatpush.bf16.msra.mxu0 %v174
    %554 = vmatmul.bf16.gmra.mxu0 %v544
    %v555 = vpop.f32.mrf.mxu0
    %v556 = vadd.f32 0.0, %v555
    %v557 = vpop.f32.mrf.mxu0
    %558 = vdwg.mxu0
    %v559 = vadd.f32 %v538, %v556
    %v560 = vxor.u32 %v559, 2147483648
    %v561 = vmul.f32 %v560, 1.442695
    %v562 = vpow.pop %v561
    %v563 = vadd.f32 %v562, 1.0
    %v564 = vrcp.pop %v563
    %v565 = vmul.f32 %v563, %v564
    %v566 = vsub.f32 1.0, %v565
    %v567 = vmul.f32 %v564, %v566
    %v568 = vadd.f32 %v564, %v567
    %vm569 = vweird.f32 %v563
    %vm570 = vweird.f32 %v564
    %vm571 = vmor %vm569, %vm570
    %v572 = vsel %vm571, %v564, %v568
    %v573 = vand.u32 2147483647, %v563
    %vm574 = vcmp.eq.f32.partialorder %v573, 8.507059e+37
    %v575 = vand.u32 %v563, 2147483648
    %v576 = vor.u32 1.1754944e-38, %v575
    %v577 = vsel %vm574, %v576, %v572
    %v578 = vmul.f32 1.0, %v577
    %v579 = vtanh.pop %v559
    %v580 = vmul.f32 %v578, %v530
    %582 = vrot.lane.b32.xlu0 %v579, 64
    %v583 = vpop.permute.xlu0 %582
    %v585 = vmul.f32 %v578, %v583
    %587 = vrot.lane.b32.xlu0 %v585, 32
    %v588 = vpop.permute.xlu0 %587
    %v590 = vadd.f32 %v580, %v588
    %v591 = vtanh.pop %v590
    %593 = vrot.lane.b32.xlu0 %v591, 64
    %v594 = vpop.permute.xlu0 %593
    %v596 = vmul.f32 %v578, %v594
    %s597 = scalar_lea.vmem [#allocation2], 56
    %v598 = vld [vmem:[%s597] sm:$0xff]
    %v599 = vpack.c.bf16 %v596, %v596
    %601 = vrot.lane.b32.xlu0 %v599, 32
    %v602 = vpop.permute.xlu0 %601
    %v604 = vsel %vm178, %v602, 0
    %606 = vmatpush.bf16.msra.mxu0 0
    %607 = vmatpush.bf16.msra.mxu0 0
    %608 = vmatpush.bf16.msra.mxu0 0
    %609 = vmatpush.bf16.msra.mxu0 0
    %610 = vmatpush.bf16.msra.mxu0 0
    %611 = vmatpush.bf16.msra.mxu0 0
    %612 = vmatpush.bf16.msra.mxu0 %v175
    %613 = vmatpush.bf16.msra.mxu0 %v174
    %614 = vmatmul.bf16.gmra.mxu0 %v604
    %v615 = vpop.f32.mrf.mxu0
    %v616 = vadd.f32 0.0, %v615
    %v617 = vpop.f32.mrf.mxu0
    %618 = vdwg.mxu0
    %v619 = vadd.f32 %v598, %v616
    %v620 = vxor.u32 %v619, 2147483648
    %v621 = vmul.f32 %v620, 1.442695
    %v622 = vpow.pop %v621
    %v623 = vadd.f32 %v622, 1.0
    %v624 = vrcp.pop %v623
    %v625 = vmul.f32 %v623, %v624
    %v626 = vsub.f32 1.0, %v625
    %v627 = vmul.f32 %v624, %v626
    %v628 = vadd.f32 %v624, %v627
    %vm629 = vweird.f32 %v623
    %vm630 = vweird.f32 %v624
    %vm631 = vmor %vm629, %vm630
    %v632 = vsel %vm631, %v624, %v628
    %v633 = vand.u32 2147483647, %v623
    %vm634 = vcmp.eq.f32.partialorder %v633, 8.507059e+37
    %v635 = vand.u32 %v623, 2147483648
    %v636 = vor.u32 1.1754944e-38, %v635
    %v637 = vsel %vm634, %v636, %v632
    %v638 = vmul.f32 1.0, %v637
    %v639 = vtanh.pop %v619
    %v640 = vmul.f32 %v638, %v590
    %642 = vrot.lane.b32.xlu0 %v639, 64
    %v643 = vpop.permute.xlu0 %642
    %v645 = vmul.f32 %v638, %v643
    %647 = vrot.lane.b32.xlu0 %v645, 32
    %v648 = vpop.permute.xlu0 %647
    %v650 = vadd.f32 %v640, %v648
    %v651 = vtanh.pop %v650
    %653 = vrot.lane.b32.xlu0 %v651, 64
    %v654 = vpop.permute.xlu0 %653
    %v656 = vmul.f32 %v638, %v654
    %658 = vrot.lane.b32.xlu0 %v656, 32
    %v659 = vpop.permute.xlu0 %658
    %661 = vst.msk [vmem:[#allocation3] sm:$0xff] %vm178, %v659
    %663 = vrot.lane.b32.xlu0 %v650, 96
    %v664 = vpop.permute.xlu0 %663
    %666 = vst.msk [vmem:[#allocation4] sm:$0xff] %vm178, %v664
    // Predicated region
    $region34: #{tpu_custom_call.1} parent=1 // pred_check
      %p667 = pneg %p64
    $region35: #{tpu_custom_call.1} parent=1 // pred_check_branch
      %669 = sbr.rel (%p667) target = $region37
    $region36: #{tpu_custom_call.1} parent=1 // pred_region
      %670 = vst.msk [vmem:[#allocation11] sm:$0xff] %vm178, %v659
    $region37: #{tpu_custom_call.1} parent=1 // pred_fallthru
      _
    // Predicated region
    $region38: #{tpu_custom_call.1} parent=1 // pred_check
      _
    $region39: #{tpu_custom_call.1} parent=1 // pred_check_branch
      %672 = sbr.rel (0) target = $region41
    $region40: #{tpu_custom_call.1} parent=1 // pred_region
      %674 = vsyncadd [#allocation7], 0
      %s676 = sshll.u32 [#allocation11], 4
      %s677 = int_to_ptr.vmem [resolvable:$true] %s676
      %s678 = sshll.u32 %s4, 4
      %s679 = int_to_ptr.hbm [resolvable:$true] %s678
      %681 = dma.vmem_to_hbm [thread:$0]  %s677, 128, %s679, [#allocation7]
    $region41: #{tpu_custom_call.1} parent=1 // pred_fallthru
      _
    // Predicated region
    $region42: #{tpu_custom_call.1} parent=1 // pred_check
      _
    $region43: #{tpu_custom_call.1} parent=1 // pred_check_branch
      %683 = sbr.rel (0) target = $region45
    $region44: #{tpu_custom_call.1} parent=1 // pred_region
      %685 = dma.done [#allocation7], 128
    $region45: #{tpu_custom_call.1} parent=1 // pred_fallthru
      _
    %686 = vsyncpa [#allocation6], 1
    %687 = vsyncpa [#allocation9], 1
    %688 = vsyncpa [#allocation7], 1

</llo_original>
